<compile_context>
chip_gen: v7x
topology: tpu7x:2x2x1
jax: 0.10.0
libtpu: 0.0.40
codegen_flags: <defaults>
</compile_context>

<pallas_src>
import functools

import jax
import jax.numpy as jnp
from jax.experimental import pallas as pl
from jax.experimental.pallas import tpu as pltpu


def _accuracy_kernel(logits_ref, lab_ref, count_ref, *, t_total, tile_t):
    # logits_ref: (1, C, tT)  lab_ref: (1, 1, tT) int32  count_ref: (1, 1, 1) int32
    t = pl.program_id(1)

    @pl.when(t == 0)
    def _():
        count_ref[...] = jnp.zeros_like(count_ref)

    logits = logits_ref[0]                                        # (C, tT)
    c = logits.shape[0]

    # First-occurrence argmax over the class (sublane) axis, per lane (frame).
    col_max = jnp.max(logits, axis=0, keepdims=True)              # (1, tT)
    cidx = jax.lax.broadcasted_iota(jnp.int32, logits.shape, 0)   # (C, tT)
    pred = jnp.min(jnp.where(logits == col_max, cidx, jnp.int32(c)),
                   axis=0, keepdims=True)                         # (1, tT) int32

    lab = lab_ref[0]                                              # (1, tT) int32

    # Mask padded lanes of the final (partial) T tile.
    lane = jax.lax.broadcasted_iota(jnp.int32, pred.shape, 1)     # (1, tT)
    valid = (t * tile_t + lane) < t_total

    match = jnp.where(valid & (pred == lab),
                      jnp.int32(1), jnp.int32(0))                 # (1, tT)
    count_ref[...] += jnp.sum(match)                              # exact int count


def _pick_tile_t(T, C, itemsize):
    # Target ~2 MiB per logits block so 2 inputs x 2 pipeline buffers stay far
    # inside the scoped-VMEM default on v5e/v6e/v7x.
    budget = 2 * 1024 * 1024
    tile = max(128, (budget // max(1, C * itemsize)) // 128 * 128)
    if T <= tile:
        return T                      # single block; "equals full dim" is legal
    return tile                       # multiple of 128; tail is masked


def lab_phnframe_accuracy(out_phnframe, lab_phnframe, *, tile_t=None):
    """out_phnframe: (B, C, T) float, lab_phnframe: (B, T) int. Returns python float."""
    B, C, T = out_phnframe.shape
    itemsize = jnp.dtype(out_phnframe.dtype).itemsize

    if tile_t is None:
        tile_t = _pick_tile_t(T, C, itemsize)
    if tile_t >= T:
        tile_t = T                    # full-extent block (always legal)
    else:
        tile_t = max(128, (tile_t // 128) * 128)   # lane-dense multiple of 128
    n_t = pl.cdiv(T, tile_t)

    labels = lab_phnframe.reshape(B, 1, T).astype(jnp.int32)

    kernel = functools.partial(_accuracy_kernel, t_total=T, tile_t=tile_t)

    cost = pl.CostEstimate(
        flops=2 * B * C * T,
        transcendentals=0,
        bytes_accessed=B * C * T * itemsize + B * T * 4 + B * 4,
    )

    counts = pl.pallas_call(
        kernel,
        out_shape=jax.ShapeDtypeStruct((B, 1, 1), jnp.int32),
        grid=(B, n_t),
        in_specs=[
            pl.BlockSpec((1, C, tile_t), lambda b, t: (b, 0, t)),
            pl.BlockSpec((1, 1, tile_t), lambda b, t: (b, 0, t)),
        ],
        out_specs=pl.BlockSpec((1, 1, 1), lambda b, t: (b, 0, 0)),
        compiler_params=pltpu.CompilerParams(
            dimension_semantics=("parallel", "arbitrary"),
            vmem_limit_bytes=32 * 1024 * 1024,
        ),
        cost_estimate=cost,
    )(out_phnframe, labels)

    n_frames = B * T
    acc = jnp.sum(counts).astype(jnp.float32) / jnp.float32(n_frames)
    # Mirrors torch's `.item()`.
    return float(acc)


if __name__ == "__main__":
    key = jax.random.PRNGKey(0)
    k1, k2 = jax.random.split(key)

    # Small phoneme-frame-style shapes: batch=2, classes=48, frames=300.
    # tile_t=128 forces multiple T tiles plus a masked partial tail tile.
    B, C, T = 2, 48, 300
    out_phnframe = jax.random.normal(k1, (B, C, T), dtype=jnp.float32)
    lab_phnframe = jax.random.randint(k2, (B, T), 0, C, dtype=jnp.int32)

    acc = lab_phnframe_accuracy(out_phnframe, lab_phnframe, tile_t=128)
    jax.block_until_ready(jnp.asarray(acc))

    # Cross-check against the pure-JAX reference of the PyTorch forward.
    pred_ref = jnp.argmax(out_phnframe, axis=1).reshape(-1)
    ref = float(jnp.mean((pred_ref == lab_phnframe.reshape(-1)).astype(jnp.float32)))
    assert abs(acc - ref) < 1e-6, (acc, ref)

    print("KERNEL_OK")
</pallas_src>

<mosaic_0001>
module attributes {stable_mosaic.version = 11 : i64} {
  func.func @_accuracy_kernel(%arg0: i32, %arg1: i32, %arg2: memref<1x48x128xf32, #tpu.memory_space<vmem>>, %arg3: memref<1x1x128xi32, #tpu.memory_space<vmem>>, %arg4: memref<1x1x1xi32, #tpu.memory_space<vmem>>) attributes {dimension_semantics = [#tpu.dimension_semantics<parallel>, #tpu.dimension_semantics<arbitrary>], iteration_bounds = array<i64: 2, 3>, scalar_prefetch = 0 : i64, scratch_operands = 0 : i64, tpu.core_type = #tpu.core_type<tc>, window_params = [{transform_indices = @transform_0, window_bounds = array<i64: 1, 48, 128>}, {transform_indices = @transform_1, window_bounds = array<i64: 1, 1, 128>}, {transform_indices = @transform_2, window_bounds = array<i64: 1, 1, 1>}]} {
    %c0_i32 = arith.constant 0 : i32
    %0 = arith.cmpi eq, %arg1, %c0_i32 : i32
    %1 = arith.extui %0 : i1 to i32
    %c0_i32_0 = arith.constant 0 : i32
    %2 = arith.cmpi ne, %1, %c0_i32_0 : i32
    scf.if %2 {
      %c0_i32_15 = arith.constant 0 : i32
      %35 = vector.broadcast %c0_i32_15 : i32 to vector<1x1x1xi32>
      %c0_16 = arith.constant 0 : index
      %c0_17 = arith.constant 0 : index
      %c0_18 = arith.constant 0 : index
      %36 = vector.load %arg4[%c0_16, %c0_17, %c0_18] : memref<1x1x1xi32, #tpu.memory_space<vmem>>, vector<1x1x1xi32>
      tpu.vector_store %arg4[%c0_16, %c0_17, %c0_18], %35 {strides = array<i32>} : memref<1x1x1xi32, #tpu.memory_space<vmem>>, vector<1x1x1xi32>,
    } else {
    }
    %c0 = arith.constant 0 : index
    %c0_1 = arith.constant 0 : index
    %c0_2 = arith.constant 0 : index
    %3 = vector.load %arg2[%c0, %c0_1, %c0_2] : memref<1x48x128xf32, #tpu.memory_space<vmem>>, vector<1x48x128xf32>
    %4 = vector.shape_cast %3 : vector<1x48x128xf32> to vector<48x128xf32>
    %cst = arith.constant dense<0xFF800000> : vector<128xf32>
    %5 = vector.multi_reduction <maximumf>, %4, %cst [0] : vector<48x128xf32> to vector<128xf32>
    %6 = vector.shape_cast %5 : vector<128xf32> to vector<1x128xf32>
    %7 = tpu.iota {dimensions = array<i32: 0>} : vector<48x128xi32>
    %8 = vector.broadcast %6 : vector<1x128xf32> to vector<48x128xf32>
    %9 = arith.cmpf oeq, %4, %8 : vector<48x128xf32>
    %c48_i32 = arith.constant 48 : i32
    %10 = vector.broadcast %c48_i32 : i32 to vector<48x128xi32>
    %11 = arith.select %9, %7, %10 : vector<48x128xi1>, vector<48x128xi32>
    %cst_3 = arith.constant dense<2147483647> : vector<128xi32>
    %12 = vector.multi_reduction <minsi>, %11, %cst_3 [0] : vector<48x128xi32> to vector<128xi32>
    %13 = vector.shape_cast %12 : vector<128xi32> to vector<1x128xi32>
    %c0_4 = arith.constant 0 : index
    %c0_5 = arith.constant 0 : index
    %c0_6 = arith.constant 0 : index
    %14 = vector.load %arg3[%c0_4, %c0_5, %c0_6] : memref<1x1x128xi32, #tpu.memory_space<vmem>>, vector<1x1x128xi32>
    %15 = vector.shape_cast %14 : vector<1x1x128xi32> to vector<1x128xi32>
    %16 = tpu.iota {dimensions = array<i32: 1>} : vector<1x128xi32>
    %c128_i32 = arith.constant 128 : i32
    %17 = arith.muli %arg1, %c128_i32 : i32
    %18 = vector.broadcast %17 : i32 to vector<1x128xi32>
    %19 = arith.addi %18, %16 : vector<1x128xi32>
    %c300_i32 = arith.constant 300 : i32
    %20 = vector.broadcast %c300_i32 : i32 to vector<1x128xi32>
    %21 = arith.cmpi slt, %19, %20 : vector<1x128xi32>
    %22 = arith.cmpi eq, %13, %15 : vector<1x128xi32>
    %23 = arith.andi %21, %22 : vector<1x128xi1>
    %c1_i32 = arith.constant 1 : i32
    %c0_i32_7 = arith.constant 0 : i32
    %24 = vector.broadcast %c1_i32 : i32 to vector<1x128xi32>
    %25 = vector.broadcast %c0_i32_7 : i32 to vector<1x128xi32>
    %26 = arith.select %23, %24, %25 : vector<1x128xi1>, vector<1x128xi32>
    %c0_8 = arith.constant 0 : index
    %c0_9 = arith.constant 0 : index
    %c0_10 = arith.constant 0 : index
    %27 = vector.load %arg4[%c0_8, %c0_9, %c0_10] : memref<1x1x1xi32, #tpu.memory_space<vmem>>, vector<1x1x1xi32>
    %28 = vector.shape_cast %26 : vector<1x128xi32> to vector<1x1x128xi32>
    %cst_11 = arith.constant dense<0> : vector<1xi32>
    %29 = vector.multi_reduction <add>, %28, %cst_11 [1, 2] : vector<1x1x128xi32> to vector<1xi32>
    %30 = vector.shape_cast %29 : vector<1xi32> to vector<1x1x1xi32>
    %31 = vector.extract %30[0, 0, 0] : i32 from vector<1x1x1xi32>
    %32 = vector.broadcast %31 : i32 to vector<1x1x1xi32>
    %33 = arith.addi %27, %32 : vector<1x1x1xi32>
    %c0_12 = arith.constant 0 : index
    %c0_13 = arith.constant 0 : index
    %c0_14 = arith.constant 0 : index
    %34 = vector.load %arg4[%c0_12, %c0_13, %c0_14] : memref<1x1x1xi32, #tpu.memory_space<vmem>>, vector<1x1x1xi32>
    tpu.vector_store %arg4[%c0_12, %c0_13, %c0_14], %33 {strides = array<i32>} : memref<1x1x1xi32, #tpu.memory_space<vmem>>, vector<1x1x1xi32>,
    return
  }
  func.func @transform_0(%arg0: i32, %arg1: i32) -> (i32, i32, i32) {
    %c0_i32 = arith.constant 0 : i32
    %c0_i32_0 = arith.constant 0 : i32
    return %arg0, %c0_i32, %arg1 : i32, i32, i32
  }
  func.func @transform_1(%arg0: i32, %arg1: i32) -> (i32, i32, i32) {
    %c0_i32 = arith.constant 0 : i32
    %c0_i32_0 = arith.constant 0 : i32
    return %arg0, %c0_i32, %arg1 : i32, i32, i32
  }
  func.func @transform_2(%arg0: i32, %arg1: i32) -> (i32, i32, i32) {
    %c0_i32 = arith.constant 0 : i32
    %c0_i32_0 = arith.constant 0 : i32
    %c0_i32_1 = arith.constant 0 : i32
    return %arg0, %c0_i32, %c0_i32_0 : i32, i32, i32
  }
}

</mosaic_0001>

<llo_original>
// kernel: tpu_custom_call.1
$region0: #{tpu_custom_call.1}
  #allocation0 [shape = 'u32[]', space=smem, size = 0x4, offset = 0x4, fixed_abs, tag = 'smem constant byte address 0x4 - core index']
  #allocation1 [shape = 'u32[144,128]{1,0:T(1,128)}', space=vmem, size = 0x12000, scoped, tag = 'internal scratch']
  %s0 = inlined_call_operand.hbm [shape: f32[2,48,300], index: 0, kind: input, shape index: {}]
  %s1 = inlined_call_operand.hbm [shape: s32[2,1,300], index: 1, kind: input, shape index: {}]
  %s2 = inlined_call_operand.vmem [shape: s32[2,1,1], index: 2, kind: output, shape index: {}]
  %s3 = sld [smem:[#allocation0]]
  $region53: #{tpu_custom_call.1} parent=0
    _
  %s5 = ssub.s32 1, %s3
  %s6 = scalar_select 0, %s5, %s3
  $region1: #{tpu_custom_call.1} parent=0
    #allocation2 [shape = 'u8[49152]{0}', space=vmem, size = 0xc000, scoped, tag = 'input window, operand 0']
    #allocation3 [shape = 's32[2]{0}', space=sflag, size = 0x8, scoped, tag = 'scoped memory for tpu_custom_call.1']
    #allocation4 [shape = 'u8[1024]{0}', space=vmem, size = 0x400, scoped, tag = 'input window, operand 1']
    #allocation5 [shape = 's32[2]{0}', space=sflag, size = 0x8, scoped, tag = 'scoped memory for tpu_custom_call.1']
    %7 = vsyncpa [#allocation3], 0
    %s8 = scalar_lea.sflag [#allocation3], 1
    %9 = vsyncpa %s8, 0
    %10 = vsyncpa [#allocation5], 0
    %s11 = scalar_lea.sflag [#allocation5], 1
    %12 = vsyncpa %s11, 0
    loop: start=0, step=1, limit=8
    $region2: #{tpu_custom_call.1} parent=1 // loop_pre_header
      _
    $region3: #{tpu_custom_call.1} parent=1 // loop_header
      %s14 = sphi 0, %s18
      %p15 = scmp.ge.s32.totalorder %s14, 8
      %s21 = sphi 0, %s33
      %s22 = sphi 0, %s29
      %s23 = sphi 0, %s21
      %s24 = sphi 0, %s22
      %s25 = sphi 0, %s23
      %s26 = sphi 0, %s24
      %s38 = sphi 0, %s40
      %s41 = sphi 0, %s38
      %s42 = sphi 0, %s41
      %s58 = sphi 0, %s42
      %s66 = sphi 0, %s68
      %s69 = sphi 0, %s66
      %s70 = sphi 0, %s69
      %s86 = sphi 0, %s70
      %s92 = sphi 0, %s94
      %s95 = sphi 0, %s92
      %s96 = sphi 0, %s95
      %s112 = sphi 0, %s96
    $region4: #{tpu_custom_call.1} parent=1 // loop_header_branch
      %17 = sbr.rel (%p15) target = $region8
    $region5: #{tpu_custom_call.1} parent=1 // loop_body
      %s19 = ssub.s32 %s14, 1
      %s20 = ssub.s32 %s14, 2
      %s27 = sadd.s32 1, %s22
      %p28 = scmp.ge.s32.totalorder %s27, 3
      %s29 = scalar_select %p28, 0, %s27
      %s30 = sadd.s32 1, %s21
      %s31 = scalar_select %p28, %s30, %s21
      %p32 = scmp.ge.s32.totalorder %s31, 2
      %s33 = scalar_select %p32, 0, %s31
      %s34 = ssub.s32 %s21, %s33
      %s35 = ssub.s32 %s22, %s29
      %s36 = sor.u32 %s34, %s35
      %p37 = scmp.eq.s32.totalorder %s36, 0
      %s39 = sadd.s32 %s38, 1
      %s40 = scalar_select %p37, %s38, %s39
      %p43 = pneg %p37
      %p44 = scmp.eq.s32.totalorder %s14, 5
      %p45 = por %p43, %p44
      %p46 = scmp.ne.s32.totalorder %s38, %s41
      %p47 = scmp.eq.s32.totalorder %s14, 0
      %p48 = por %p46, %p47
      %p49 = scmp.ne.s32.totalorder %s38, %s41
      %p50 = scmp.eq.s32.totalorder %s19, 5
      %p51 = por %p49, %p50
      %p52 = scmp.ne.s32.totalorder %s41, %s42
      %p53 = scmp.eq.s32.totalorder %s19, 0
      %p54 = por %p52, %p53
      %p55 = scmp.ne.s32.totalorder %s41, %s42
      %p56 = scmp.eq.s32.totalorder %s20, 5
      %p57 = por %p55, %p56
      %p59 = scmp.ne.s32.totalorder %s42, %s58
      %p60 = scmp.eq.s32.totalorder %s20, 0
      %p61 = por %p59, %p60
      %s62 = ssub.s32 %s21, %s33
      %s63 = ssub.s32 %s22, %s29
      %s64 = sor.u32 %s62, %s63
      %p65 = scmp.eq.s32.totalorder %s64, 0
      %s67 = sadd.s32 %s66, 1
      %s68 = scalar_select %p65, %s66, %s67
      %p71 = pneg %p65
      %p72 = scmp.eq.s32.totalorder %s14, 5
      %p73 = por %p71, %p72
      %p74 = scmp.ne.s32.totalorder %s66, %s69
      %p75 = scmp.eq.s32.totalorder %s14, 0
      %p76 = por %p74, %p75
      %p77 = scmp.ne.s32.totalorder %s66, %s69
      %p78 = scmp.eq.s32.totalorder %s19, 5
      %p79 = por %p77, %p78
      %p80 = scmp.ne.s32.totalorder %s69, %s70
      %p81 = scmp.eq.s32.totalorder %s19, 0
      %p82 = por %p80, %p81
      %p83 = scmp.ne.s32.totalorder %s69, %s70
      %p84 = scmp.eq.s32.totalorder %s20, 5
      %p85 = por %p83, %p84
      %p87 = scmp.ne.s32.totalorder %s70, %s86
      %p88 = scmp.eq.s32.totalorder %s20, 0
      %p89 = por %p87, %p88
      %s90 = ssub.s32 %s21, %s33
      %p91 = scmp.eq.s32.totalorder %s90, 0
      %s93 = sadd.s32 %s92, 1
      %s94 = scalar_select %p91, %s92, %s93
      %p97 = pneg %p91
      %p98 = scmp.eq.s32.totalorder %s14, 5
      %p99 = por %p97, %p98
      %p100 = scmp.ne.s32.totalorder %s92, %s95
      %p101 = scmp.eq.s32.totalorder %s14, 0
      %p102 = por %p100, %p101
      %p103 = scmp.ne.s32.totalorder %s92, %s95
      %p104 = scmp.eq.s32.totalorder %s19, 5
      %p105 = por %p103, %p104
      %p106 = scmp.ne.s32.totalorder %s95, %s96
      %p107 = scmp.eq.s32.totalorder %s19, 0
      %p108 = por %p106, %p107
      %p109 = scmp.ne.s32.totalorder %s95, %s96
      %p110 = scmp.eq.s32.totalorder %s20, 5
      %p111 = por %p109, %p110
      %p113 = scmp.ne.s32.totalorder %s96, %s112
      %p114 = scmp.eq.s32.totalorder %s20, 0
      %p115 = por %p113, %p114
      %p116 = scmp.le.s32.totalorder 1, %s14
      %p117 = scmp.lt.s32.totalorder %s14, 7
      %p118 = pnand %p116, %p117
      %p119 = pneg %p118
      // Predicated region
      $region9: #{tpu_custom_call.1} parent=5 // pred_check
        _
      $region10: #{tpu_custom_call.1} parent=5 // pred_check_branch
        %121 = sbr.rel (%p118) target = $region12
      $region11: #{tpu_custom_call.1} parent=5 // pred_region
        %s122 = ssub.s32 %s14, 1
      $region12: #{tpu_custom_call.1} parent=5 // pred_fallthru
        _
      %p123 = scmp.lt.s32.totalorder %s14, 6
      // Predicated region
      $region13: #{tpu_custom_call.1} parent=5 // pred_check
        %p124 = pneg %p123
      $region14: #{tpu_custom_call.1} parent=5 // pred_check_branch
        %126 = sbr.rel (%p124) target = $region16
      $region15: #{tpu_custom_call.1} parent=5 // pred_region
        // Predicated region
        $region17: #{tpu_custom_call.1} parent=15 // pred_check
          %p127 = pneg %p48
        $region18: #{tpu_custom_call.1} parent=15 // pred_check_branch
          %129 = sbr.rel (%p127) target = $region20
        $region19: #{tpu_custom_call.1} parent=15 // pred_region
          %s130 = sand.u32 %s38, 1
          %s131 = scalar_lea.sflag [#allocation3], %s130
          %s132 = sand.u32 %s38, 1
          %s133 = smul.addr %s132, 48
          %s134 = scalar_lea.vmem [#allocation2], %s133
          %s136 = ssub.s32 768, 768
          %137 = vsyncadd %s131, %s136
          %s138 = smul.addr %s21, 18
          %s139 = sadd.s32 %s22, %s138
          %s140 = smul.addr %s139, 128
          %s141 = scalar_lea.hbm %s0, %s140
          %s142 = sshll.u32 %s134, 4
          %s143 = int_to_ptr.vmem [resolvable:$true] %s142
          %148 = dma.hbm_to_vmem [thread:$0]  %s141, 768, %s143, %s131, 384, 128, 8
        $region20: #{tpu_custom_call.1} parent=15 // pred_fallthru
          _
        // Predicated region
        $region21: #{tpu_custom_call.1} parent=15 // pred_check
          %p149 = pneg %p76
        $region22: #{tpu_custom_call.1} parent=15 // pred_check_branch
          %151 = sbr.rel (%p149) target = $region24
        $region23: #{tpu_custom_call.1} parent=15 // pred_region
          %s152 = sand.u32 %s66, 1
          %s153 = scalar_lea.sflag [#allocation5], %s152
          %s154 = sand.u32 %s66, 1
          %s155 = scalar_lea.vmem [#allocation4], %s154
          %s157 = ssub.s32 16, 16
          %158 = vsyncadd %s153, %s157
          %s159 = smul.addr %s21, 3
          %s160 = sadd.s32 %s22, %s159
          %s161 = smul.addr %s160, 16
          %s162 = scalar_lea.hbm %s1, %s161
          %s164 = sshll.u32 %s155, 4
          %s165 = int_to_ptr.vmem [resolvable:$true] %s164
          %167 = dma.hbm_to_vmem [thread:$0]  %s162, 16, %s165, %s153
        $region24: #{tpu_custom_call.1} parent=15 // pred_fallthru
          _
      $region16: #{tpu_custom_call.1} parent=5 // pred_fallthru
        _
      %p168 = scmp.le.s32.totalorder 1, %s14
      %p169 = scmp.lt.s32.totalorder %s14, 7
      %p170 = pnand %p168, %p169
      %p171 = pneg %p170
      // Predicated region
      $region25: #{tpu_custom_call.1} parent=5 // pred_check
        _
      $region26: #{tpu_custom_call.1} parent=5 // pred_check_branch
        %173 = sbr.rel (%p170) target = $region28
      $region27: #{tpu_custom_call.1} parent=5 // pred_region
        %s174 = ssub.s32 %s14, 1
        %s175 = sand.u32 %s41, 1
        %s176 = scalar_lea.sflag [#allocation3], %s175
        %s177 = sand.u32 %s41, 1
        %s178 = smul.addr %s177, 48
        %s179 = scalar_lea.vmem [#allocation2], %s178
        // Predicated region
        $region29: #{tpu_custom_call.1} parent=27 // pred_check
          %p180 = pneg %p54
        $region30: #{tpu_custom_call.1} parent=27 // pred_check_branch
          %182 = sbr.rel (%p180) target = $region32
        $region31: #{tpu_custom_call.1} parent=27 // pred_region
          %183 = dma.done %s176, 768
        $region32: #{tpu_custom_call.1} parent=27 // pred_fallthru
          _
        %s184 = sand.u32 %s69, 1
        %s185 = scalar_lea.sflag [#allocation5], %s184
        %s186 = sand.u32 %s69, 1
        %s187 = scalar_lea.vmem [#allocation4], %s186
        // Predicated region
        $region33: #{tpu_custom_call.1} parent=27 // pred_check
          %p188 = pneg %p82
        $region34: #{tpu_custom_call.1} parent=27 // pred_check_branch
          %190 = sbr.rel (%p188) target = $region36
        $region35: #{tpu_custom_call.1} parent=27 // pred_region
          %191 = dma.done %s185, 16
        $region36: #{tpu_custom_call.1} parent=27 // pred_fallthru
          _
        %s192 = sand.u32 %s41, 1
        %s193 = scalar_lea.sflag [#allocation3], %s192
        %s194 = sand.u32 %s41, 1
        %s195 = smul.addr %s194, 48
        %s196 = scalar_lea.vmem [#allocation2], %s195
        %p197 = pneg %p54
        %p198 = pneg %p51
        %s199 = sand.u32 %s69, 1
        %s200 = scalar_lea.sflag [#allocation5], %s199
        %s201 = sand.u32 %s69, 1
        %s202 = scalar_lea.vmem [#allocation4], %s201
        %p203 = pneg %p82
        %p204 = pneg %p79
        %p205 = pneg %p108
        %p206 = pneg %p105
        %p207 = scmp.lt.s32.totalorder %s23, 1
        %s208 = scalar_select %p207, %s23, 1
        %s209 = scalar_lea.vmem %s2, %s208
        %p210 = scmp.lt.s32.totalorder %s23, 1
        %s211 = scalar_select %p210, %s23, 1
        %s212 = scalar_lea.vmem %s2, %s211
        %p213 = scmp.eq.s32.totalorder %s24, 0
        // Predicated region
        $region37: #{tpu_custom_call.1} parent=27 // pred_check
          %p214 = pneg %p213
        $region38: #{tpu_custom_call.1} parent=27 // pred_check_branch
          %216 = sbr.rel (%p214) target = $region40
        $region39: #{tpu_custom_call.1} parent=27 // pred_region
          %vm217 = vcmask 0
          %218 = vst.msk [vmem:[%s212] sm:$0x1] %vm217, 0
        $region40: #{tpu_custom_call.1} parent=27 // pred_fallthru
          _
        %v219 = vld [vmem:[%s179] sm:$0xff]
        %v220 = vld [vmem:[%s179 + $0x8] sm:$0xff]
        %v221 = vld [vmem:[%s179 + $0x10] sm:$0xff]
        %v222 = vld [vmem:[%s179 + $0x18] sm:$0xff]
        %v223 = vld [vmem:[%s179 + $0x20] sm:$0xff]
        %v224 = vld [vmem:[%s179 + $0x28] sm:$0xff]
        %v225 = vmax.f32 %v219, %v223
        %v226 = vmax.f32 %v220, %v224
        %v227 = vmax.f32 %v225, %v226
        %v228 = vmax.f32 %v221, %v222
        %v229 = vmax.f32 %v227, %v228
        %v230 = vrot.slane %v229, 4
        %v231 = vmax.f32 %v229, %v230
        %v232 = vrot.slane %v231, 2
        %v233 = vmax.f32 %v231, %v232
        %v234 = vrot.slane %v233, 1
        %v235 = vmax.f32 %v233, %v234
        %v236 = vlaneseq
        %v237 = vshrl.u32 %v236, 7
        %v238 = vadd.s32 %v237, 8
        %v239 = vadd.s32 %v237, 16
        %v240 = vadd.s32 %v237, 24
        %v241 = vadd.s32 %v237, 32
        %v242 = vadd.s32 %v237, 40
        %vm243 = vcmp.eq.f32.partialorder %v219, %v235
        %vm244 = vcmp.eq.f32.partialorder %v220, %v235
        %vm245 = vcmp.eq.f32.partialorder %v221, %v235
        %vm246 = vcmp.eq.f32.partialorder %v222, %v235
        %vm247 = vcmp.eq.f32.partialorder %v223, %v235
        %vm248 = vcmp.eq.f32.partialorder %v224, %v235
        %v249 = vsel %vm243, %v237, 48
        %v250 = vsel %vm244, %v238, 48
        %v251 = vsel %vm245, %v239, 48
        %v252 = vsel %vm246, %v240, 48
        %v253 = vsel %vm247, %v241, 48
        %v254 = vsel %vm248, %v242, 48
        %vm255 = vcmp.lt.s32.totalorder %v249, %v253
        %v256 = vsel %vm255, %v249, %v253
        %vm257 = vcmp.lt.s32.totalorder %v250, %v254
        %v258 = vsel %vm257, %v250, %v254
        %vm259 = vcmp.lt.s32.totalorder %v256, %v258
        %v260 = vsel %vm259, %v256, %v258
        %vm261 = vcmp.lt.s32.totalorder %v251, %v252
        %v262 = vsel %vm261, %v251, %v252
        %vm263 = vcmp.lt.s32.totalorder %v260, %v262
        %v264 = vsel %vm263, %v260, %v262
        %v265 = vrot.slane %v264, 4
        %vm266 = vcmp.lt.s32.totalorder %v264, %v265
        %v267 = vsel %vm266, %v264, %v265
        %v268 = vrot.slane %v267, 2
        %vm269 = vcmp.lt.s32.totalorder %v267, %v268
        %v270 = vsel %vm269, %v267, %v268
        %v271 = vrot.slane %v270, 1
        %vm272 = vcmp.lt.s32.totalorder %v270, %v271
        %v273 = vsel %vm272, %v270, %v271
        %v274 = vld [vmem:[%s187] sm:$0x1]
        %v275 = vlaneseq
        %v276 = vand.u32 %v275, 127
        %s277 = smul.u32 %s24, 128
        %v278 = vstv %s277
        %v279 = vadd.s32 %v278, %v276
        %vm280 = vcmp.lt.s32.totalorder %v279, 300
        %vm281 = vcmp.eq.s32.totalorder %v273, %v274
        %vm282 = vmand %vm280, %vm281
        %v283 = vsel %vm282, 1, 0
        %v284 = vld [vmem:[%s212] sm:$0x1]
        %vm285 = vcmask 1040384
        %v286 = vsel %vm285, %v283, 0
        %v287 = vand.u32 %v286, 65535
        %v288 = vshrl.u32 %v286, 16
        %v289 = vcvt.s32.f32 %v287
        %v290 = vcvt.s32.f32 %v288
        %291 = vadd.xlane.f32.xlu0 %v289
        %v292 = vpop.xlane.xlu0 %291
        %293 = vadd.xlane.f32.xlu0 %v290
        %v294 = vpop.xlane.xlu0 %293
        %v295 = vcvt.f32.s32 %v292
        %v296 = vcvt.f32.s32 %v294
        %v297 = vshll.u32 %v296, 16
        %v298 = vadd.s32 %v297, %v295
        %v299 = vrot.slane %v298, 4
        %v300 = vadd.s32 %v298, %v299
        %v301 = vrot.slane %v300, 2
        %v302 = vadd.s32 %v300, %v301
        %v303 = vrot.slane %v302, 1
        %v304 = vadd.s32 %v302, %v303
        %s305 = vtos %v304
        %v306 = vstv %s305
        %v307 = vadd.s32 %v284, %v306
        %vm308 = vcmask 0
        %309 = vst.msk [vmem:[%s212] sm:$0x1] %vm308, %v307
        %p310 = scmp.lt.s32.totalorder %s23, 1
        %s311 = scalar_select %p310, %s23, 1
        %s312 = scalar_lea.vmem %s2, %s311
        // Predicated region
        $region41: #{tpu_custom_call.1} parent=27 // pred_check
          %p313 = pneg %p105
        $region42: #{tpu_custom_call.1} parent=27 // pred_check_branch
          %315 = sbr.rel (%p313) target = $region44
        $region43: #{tpu_custom_call.1} parent=27 // pred_region
          _
        $region44: #{tpu_custom_call.1} parent=27 // pred_fallthru
          _
      $region28: #{tpu_custom_call.1} parent=5 // pred_fallthru
        _
      %p316 = scmp.le.s32.totalorder 2, %s14
      // Predicated region
      $region45: #{tpu_custom_call.1} parent=5 // pred_check
        %p317 = pneg %p316
      $region46: #{tpu_custom_call.1} parent=5 // pred_check_branch
        %319 = sbr.rel (%p317) target = $region48
      $region47: #{tpu_custom_call.1} parent=5 // pred_region
        %s320 = ssub.s32 %s14, 2
        // Predicated region
        $region49: #{tpu_custom_call.1} parent=47 // pred_check
          %p321 = pneg %p111
        $region50: #{tpu_custom_call.1} parent=47 // pred_check_branch
          %323 = sbr.rel (%p321) target = $region52
        $region51: #{tpu_custom_call.1} parent=47 // pred_region
          %p324 = scmp.lt.s32.totalorder %s25, 1
          %s325 = scalar_select %p324, %s25, 1
          %s326 = scalar_lea.vmem %s2, %s325
        $region52: #{tpu_custom_call.1} parent=47 // pred_fallthru
          _
      $region48: #{tpu_custom_call.1} parent=5 // pred_fallthru
        _
    $region6: #{tpu_custom_call.1} parent=1 // loop_footer
      %s18 = sadd.s32 1, %s14
    $region7: #{tpu_custom_call.1} parent=1 // loop_footer_branch
      %13 = sbr.rel target = $region3
    $region8: #{tpu_custom_call.1} parent=1 // loop_exit
      _
    %327 = vsyncpa [#allocation3], 1
    %s328 = scalar_lea.sflag [#allocation3], 1
    %329 = vsyncpa %s328, 1
    %330 = vsyncpa [#allocation5], 1
    %s331 = scalar_lea.sflag [#allocation5], 1
    %332 = vsyncpa %s331, 1

</llo_original>
